<compile_context>
chip_gen: v7x
topology: tpu7x:2x2x1
jax: 0.10.0
libtpu: 0.0.40
codegen_flags: <defaults>
</compile_context>

<pallas_src>
import jax
import jax.numpy as jnp
from jax.experimental import pallas as pl
from jax.experimental.pallas import tpu as pltpu


def _round_up(x, m):
    return ((x + m - 1) // m) * m


def _round_down(x, m):
    return (x // m) * m


# ----------------------------- forward kernel ------------------------------ #
def _make_fwd_kernel(hw_actual, bhw, need_hw_mask):
    def kernel(x_ref, w_ref, b_ref, o_ref, acc_ref):
        # x_ref: [bn, bhw, C] (native dtype, e.g. bf16)
        # w_ref: [C, Kp] bf16 (whole array, VMEM resident, 1/HW pre-folded)
        # b_ref: [1, Kp] f32 (whole array, VMEM resident)
        # o_ref: [bn, Kp] f32   acc_ref: [bn, C] f32 scratch
        hw_idx = pl.program_id(1)

        @pl.when(hw_idx == 0)
        def _():
            acc_ref[...] = jnp.zeros_like(acc_ref)

        x = x_ref[...]
        if need_hw_mask:
            # HW does not divide evenly into bhw blocks: zero the overhanging
            # rows (OOB block reads are undefined, not zero).
            hw_ids = jax.lax.broadcasted_iota(jnp.int32, (bhw, 1), 0)
            valid = (hw_idx * bhw + hw_ids) < hw_actual          # [bhw, 1]
            x = jnp.where(valid[None, :, :], x, jnp.zeros((), x.dtype))

        # Sublane-axis reduce (HW is second-to-last) accumulated in f32.
        acc_ref[...] += jnp.sum(x.astype(jnp.float32), axis=1)

        @pl.when(hw_idx == pl.num_programs(1) - 1)
        def _():
            # bf16 x bf16 epilogue dot (single MXU pass); mean scale is folded
            # into w, so acc holds the plain sum over HW.
            logits = jnp.dot(acc_ref[...].astype(jnp.bfloat16), w_ref[...],
                             preferred_element_type=jnp.float32)
            o_ref[...] = logits + b_ref[...]

    return kernel


def head_forward(x, weight, bias, *, x_block_bytes=4 * 1024 * 1024):
    """Global average pool over spatial positions + Linear.

    x: channels-last features, [N, H, W, C] or [N, HW, C] (bf16 or f32).
       (Channels-last avoids any HBM relayout; if your backbone is NCHW,
       transpose once outside — or better, keep the backbone channels-last.)
    weight: [in_channels, num_classes] f32.  bias: [num_classes] f32.
    Returns cls_score [N, num_classes] f32.
    """
    if x.ndim == 4:
        n_, h_, w_, c_ = x.shape
        x = x.reshape(n_, h_ * w_, c_)        # free for channels-last layout
    elif x.ndim != 3:
        raise ValueError("expected [N, H, W, C] or [N, HW, C] channels-last features")
    N, HW, C = x.shape
    K = weight.shape[1]
    Kp = _round_up(K, 128)
    itemsize = x.dtype.itemsize

    # Batch block: whole batch when small (block == full dim is always legal),
    # else 128 rows (multiple of 8, good MXU M for the epilogue matmul).
    bn = N if N <= 128 else 128

    # HW block from a per-block VMEM budget; Pallas double-buffers it.
    bhw = _round_down(max(8, x_block_bytes // max(1, bn * C * itemsize)), 8)
    bhw = min(bhw, _round_up(HW, 8))
    if bhw >= HW:
        bhw = HW                               # single full-extent block
    need_hw_mask = (HW % bhw) != 0

    grid = (pl.cdiv(N, bn), pl.cdiv(HW, bhw))

    # Weights: fold 1/HW mean scale, cast to bf16, pad classes to a lane-dense
    # multiple of 128 (tiny arrays, negligible wrapper cost).
    w = (weight.astype(jnp.float32) * (1.0 / HW)).astype(jnp.bfloat16)
    w = jnp.pad(w, ((0, 0), (0, Kp - K)))
    b = jnp.pad(bias.astype(jnp.float32).reshape(1, K), ((0, 0), (0, Kp - K)))

    # Explicit VMEM budget: 2x x block + single w/b copies + 2x out + acc +
    # headroom for the in-kernel f32 temp of the reduce.
    needed = (2 * bn * bhw * C * itemsize          # x, double-buffered
              + bn * bhw * C * 4                   # f32 temp of the reduce
              + w.size * 2 + b.size * 4            # single-buffered constants
              + 2 * bn * Kp * 4                    # out, double-buffered
              + bn * _round_up(C, 128) * 4)        # acc scratch
    vmem_limit = min(64 * 1024 * 1024, max(32 * 1024 * 1024, 2 * needed))

    out = pl.pallas_call(
        _make_fwd_kernel(HW, bhw, need_hw_mask),
        out_shape=jax.ShapeDtypeStruct((N, Kp), jnp.float32),
        grid_spec=pltpu.PrefetchScalarGridSpec(
            num_scalar_prefetch=0,
            grid=grid,
            in_specs=[
                pl.BlockSpec((bn, bhw, C), lambda ni, hi: (ni, hi, 0)),
                # Constant operands: whole-array VMEM residents (one copy,
                # fetched once — i.e. single-buffered, per review).
                pl.BlockSpec(memory_space=pltpu.MemorySpace.VMEM),
                pl.BlockSpec(memory_space=pltpu.MemorySpace.VMEM),
            ],
            out_specs=pl.BlockSpec((bn, Kp), lambda ni, hi: (ni, 0)),
            scratch_shapes=[pltpu.VMEM((bn, C), jnp.float32)],
        ),
        compiler_params=pltpu.CompilerParams(
            dimension_semantics=("parallel", "arbitrary"),
            vmem_limit_bytes=int(vmem_limit)),
    )(x, w, b)
    return out[:, :K]


# -------------------------- cross-entropy kernel --------------------------- #
def _make_ce_kernel(n_actual, k_actual, bn):
    def kernel(score_ref, label_ref, loss_ref, acc_ref):
        # score_ref: [bn, Kp] f32   label_ref: [bn, 1] i32
        # loss_ref: [1, 1] f32      acc_ref: [1, 1] f32 scratch
        i = pl.program_id(0)

        @pl.when(i == 0)
        def _():
            acc_ref[...] = jnp.zeros_like(acc_ref)

        s = score_ref[...]
        lbl = label_ref[...]
        k_idx = jax.lax.broadcasted_iota(jnp.int32, s.shape, 1)
        valid_k = k_idx < k_actual
        s_m = jnp.where(valid_k, s, jnp.float32(-1e30))       # mask padded classes
        m = jnp.max(s_m, axis=-1, keepdims=True)
        lse = m + jnp.log(jnp.sum(jnp.exp(s_m - m), axis=-1, keepdims=True))
        logp = s_m - lse                                       # masked log-softmax
        onehot = (k_idx == lbl).astype(jnp.float32)
        contrib = jnp.where(valid_k, onehot * logp, 0.0)
        nll = -jnp.sum(contrib, axis=-1, keepdims=True)        # [bn, 1]

        row_idx = i * bn + jax.lax.broadcasted_iota(jnp.int32, (bn, 1), 0)
        valid_row = (row_idx < n_actual).astype(jnp.float32)   # mask padded rows
        acc_ref[...] += jnp.sum(nll * valid_row, axis=0, keepdims=True)

        @pl.when(i == pl.num_programs(0) - 1)
        def _():
            loss_ref[...] = acc_ref[...] * (1.0 / float(n_actual))

    return kernel


def cross_entropy_loss(cls_score, label):
    """cls_score [N, K] f32, label [N] int -> scalar f32 (mean CE, hard labels)."""
    N, K = cls_score.shape
    bn = min(512, _round_up(N, 8))
    Np = _round_up(N, bn)
    Kp = _round_up(K, 128)

    # cls_score is tiny; zero-padding here keeps padded rows NaN-free.
    s = jnp.pad(cls_score.astype(jnp.float32), ((0, Np - N), (0, Kp - K)))
    lbl = jnp.pad(label.astype(jnp.int32).reshape(N, 1), ((0, Np - N), (0, 0)))

    out = pl.pallas_call(
        _make_ce_kernel(N, K, bn),
        out_shape=jax.ShapeDtypeStruct((1, 1), jnp.float32),
        grid_spec=pltpu.PrefetchScalarGridSpec(
            num_scalar_prefetch=0,
            grid=(Np // bn,),
            in_specs=[
                pl.BlockSpec((bn, Kp), lambda i: (i, 0)),
                pl.BlockSpec((bn, 1), lambda i: (i, 0)),
            ],
            out_specs=pl.BlockSpec((1, 1), lambda i: (0, 0)),
            scratch_shapes=[pltpu.VMEM((1, 1), jnp.float32)],
        ),
        compiler_params=pltpu.CompilerParams(
            dimension_semantics=("arbitrary",)),
    )(s, lbl)
    return out[0, 0]


# ------------------------------- head module -------------------------------- #
class BaseHeadPallas:
    """Pallas port of BaseHead (concrete avgpool+FC forward, hard-label CE loss)."""

    def __init__(self, num_classes, in_channels,
                 loss_weight=1.0, multi_class=False, label_smooth_eps=0.0):
        self.num_classes = num_classes
        self.in_channels = in_channels
        self.loss_weight = loss_weight
        self.multi_class = multi_class
        self.label_smooth_eps = label_smooth_eps
        self.init_weights()

    def init_weights(self):
        # deterministic: normal(std=0.01) weights, zero bias (mmaction default init)
        kw = jax.random.PRNGKey(0)
        self.fc_weight = 0.01 * jax.random.normal(
            kw, (self.in_channels, self.num_classes), dtype=jnp.float32)
        self.fc_bias = jnp.zeros((self.num_classes,), dtype=jnp.float32)

    def forward(self, x):
        # x: channels-last features [N, H, W, C] (or [N, HW, C]).
        return head_forward(x, self.fc_weight, self.fc_bias)

    def loss(self, cls_score, label):
        losses = {}
        if label.ndim == 0:
            label = label[None]
        # TODO(synk): top_k_accuracy is a host-side numpy metric in the reference
        # (detach().cpu().numpy()); not a kernel hot path, skipped.
        if self.multi_class:
            # TODO(synk): multi_class path uses BCE-with-logits on soft/one-hot
            # labels (optionally label-smoothed); not covered by the CE kernel.
            raise NotImplementedError("multi_class BCE path not implemented")
        losses["loss_cls"] = self.loss_weight * cross_entropy_loss(cls_score, label)
        return losses


# ----------------------------------- main ----------------------------------- #
if __name__ == "__main__":
    N, H, W, C = 2, 16, 16, 32
    NUM_CLASSES = 10

    key = jax.random.PRNGKey(0)
    kx, kl = jax.random.split(key)
    # channels-last (NHWC) backbone features in bf16 (half the HBM bytes)
    x = jax.random.normal(kx, (N, H, W, C), dtype=jnp.float32).astype(jnp.bfloat16)
    label = jax.random.randint(kl, (N,), 0, NUM_CLASSES, dtype=jnp.int32)

    head = BaseHeadPallas(num_classes=NUM_CLASSES, in_channels=C)

    cls_score = head.forward(x)
    losses = head.loss(cls_score, label)
    jax.block_until_ready(cls_score)
    jax.block_until_ready(losses["loss_cls"])

    # reference check against plain JAX (same bf16 input values, f32 math)
    xf = x.astype(jnp.float32)
    pooled_ref = xf.reshape(N, H * W, C).mean(axis=1)
    score_ref = pooled_ref @ head.fc_weight + head.fc_bias
    logp_ref = jax.nn.log_softmax(score_ref, axis=-1)
    loss_ref = -jnp.mean(logp_ref[jnp.arange(N), label])

    assert jnp.allclose(cls_score, score_ref, rtol=2e-2, atol=2e-3), "forward mismatch"
    assert jnp.allclose(losses["loss_cls"], loss_ref, rtol=1e-2, atol=2e-3), "loss mismatch"

    # Also exercise the multi-block HW path with a partial (masked) tail block
    # by forcing a small x-block byte budget (bhw=24, HW=256 -> 11 blocks).
    cls_score_tail = head_forward(
        x, head.fc_weight, head.fc_bias,
        x_block_bytes=N * C * x.dtype.itemsize * 24)
    jax.block_until_ready(cls_score_tail)
    assert jnp.allclose(cls_score_tail, score_ref, rtol=2e-2, atol=2e-3), \
        "forward mismatch (masked HW-tail path)"

    print("KERNEL_OK")
</pallas_src>

<mosaic_0001>
module attributes {stable_mosaic.version = 11 : i64} {
  func.func @kernel(%arg0: i32, %arg1: i32, %arg2: memref<2x256x32xbf16, #tpu.memory_space<vmem>>, %arg3: memref<32x128xbf16, #tpu.memory_space<vmem>>, %arg4: memref<1x128xf32, #tpu.memory_space<vmem>>, %arg5: memref<2x128xf32, #tpu.memory_space<vmem>>, %arg6: memref<2x32xf32, #tpu.memory_space<vmem>>) attributes {dimension_semantics = [#tpu.dimension_semantics<parallel>, #tpu.dimension_semantics<arbitrary>], iteration_bounds = array<i64: 1, 1>, scalar_prefetch = 0 : i64, scratch_operands = 1 : i64, tpu.core_type = #tpu.core_type<tc>, window_params = [{transform_indices = @transform_0, window_bounds = array<i64: 2, 256, 32>}, {pipeline_mode = #tpu.pipeline_mode<synchronous>, transform_indices = @transform_1, window_bounds = array<i64: 32, 128>}, {pipeline_mode = #tpu.pipeline_mode<synchronous>, transform_indices = @transform_2, window_bounds = array<i64: 1, 128>}, {transform_indices = @transform_3, window_bounds = array<i64: 2, 128>}]} {
    %c0_i32 = arith.constant 0 : i32
    %0 = arith.cmpi eq, %arg1, %c0_i32 : i32
    %1 = arith.extui %0 : i1 to i32
    %c0_i32_0 = arith.constant 0 : i32
    %2 = arith.cmpi ne, %1, %c0_i32_0 : i32
    scf.if %2 {
      %cst_9 = arith.constant 0.000000e+00 : f32
      %12 = vector.broadcast %cst_9 : f32 to vector<2x32xf32>
      %c0_10 = arith.constant 0 : index
      %c0_11 = arith.constant 0 : index
      %13 = vector.load %arg6[%c0_10, %c0_11] : memref<2x32xf32, #tpu.memory_space<vmem>>, vector<2x32xf32>
      tpu.vector_store %arg6[%c0_10, %c0_11], %12 {strides = array<i32>} : memref<2x32xf32, #tpu.memory_space<vmem>>, vector<2x32xf32>,
    } else {
    }
    %c0 = arith.constant 0 : index
    %c0_1 = arith.constant 0 : index
    %c0_2 = arith.constant 0 : index
    %3 = vector.load %arg2[%c0, %c0_1, %c0_2] : memref<2x256x32xbf16, #tpu.memory_space<vmem>>, vector<2x256x32xbf16>
    %c0_3 = arith.constant 0 : index
    %c0_4 = arith.constant 0 : index
    %4 = vector.load %arg6[%c0_3, %c0_4] : memref<2x32xf32, #tpu.memory_space<vmem>>, vector<2x32xf32>
    %5 = arith.extf %3 : vector<2x256x32xbf16> to vector<2x256x32xf32>
    %cst = arith.constant dense<0.000000e+00> : vector<2x32xf32>
    %6 = vector.multi_reduction <add>, %5, %cst [1] : vector<2x256x32xf32> to vector<2x32xf32>
    %7 = arith.addf %4, %6 : vector<2x32xf32>
    %c0_5 = arith.constant 0 : index
    %c0_6 = arith.constant 0 : index
    %8 = vector.load %arg6[%c0_5, %c0_6] : memref<2x32xf32, #tpu.memory_space<vmem>>, vector<2x32xf32>
    tpu.vector_store %arg6[%c0_5, %c0_6], %7 {strides = array<i32>} : memref<2x32xf32, #tpu.memory_space<vmem>>, vector<2x32xf32>,
    %c0_i32_7 = arith.constant 0 : i32
    %9 = arith.cmpi eq, %arg1, %c0_i32_7 : i32
    %10 = arith.extui %9 : i1 to i32
    %c0_i32_8 = arith.constant 0 : i32
    %11 = arith.cmpi ne, %10, %c0_i32_8 : i32
    scf.if %11 {
      %c0_9 = arith.constant 0 : index
      %c0_10 = arith.constant 0 : index
      %12 = vector.load %arg6[%c0_9, %c0_10] : memref<2x32xf32, #tpu.memory_space<vmem>>, vector<2x32xf32>
      %13 = arith.truncf %12 : vector<2x32xf32> to vector<2x32xbf16>
      %c0_11 = arith.constant 0 : index
      %c0_12 = arith.constant 0 : index
      %14 = vector.load %arg3[%c0_11, %c0_12] : memref<32x128xbf16, #tpu.memory_space<vmem>>, vector<32x128xbf16>
      %cst_13 = arith.constant dense<0.000000e+00> : vector<2x128xf32>
      %15 = tpu.matmul %13, %14, %cst_13 {dimension_numbers = #tpu.dot_dimension_numbers<[1], [0], [0], [1], [0, 0, 1, 1], [], []>} : vector<2x32xbf16>, vector<32x128xbf16>, vector<2x128xf32> -> vector<2x128xf32>
      %c0_14 = arith.constant 0 : index
      %c0_15 = arith.constant 0 : index
      %16 = vector.load %arg4[%c0_14, %c0_15] : memref<1x128xf32, #tpu.memory_space<vmem>>, vector<1x128xf32>
      %17 = vector.broadcast %16 : vector<1x128xf32> to vector<2x128xf32>
      %18 = arith.addf %15, %17 : vector<2x128xf32>
      %c0_16 = arith.constant 0 : index
      %c0_17 = arith.constant 0 : index
      %19 = vector.load %arg5[%c0_16, %c0_17] : memref<2x128xf32, #tpu.memory_space<vmem>>, vector<2x128xf32>
      tpu.vector_store %arg5[%c0_16, %c0_17], %18 {strides = array<i32>} : memref<2x128xf32, #tpu.memory_space<vmem>>, vector<2x128xf32>,
    } else {
    }
    return
  }
  func.func @transform_0(%arg0: i32, %arg1: i32) -> (i32, i32, i32) {
    %c0_i32 = arith.constant 0 : i32
    %c0_i32_0 = arith.constant 0 : i32
    return %arg0, %arg1, %c0_i32 : i32, i32, i32
  }
  func.func @transform_1(%arg0: i32, %arg1: i32) -> (i32, i32) {
    %c0_i32 = arith.constant 0 : i32
    %c0_i32_0 = arith.constant 0 : i32
    %c0_i32_1 = arith.constant 0 : i32
    return %c0_i32, %c0_i32_0 : i32, i32
  }
  func.func @transform_2(%arg0: i32, %arg1: i32) -> (i32, i32) {
    %c0_i32 = arith.constant 0 : i32
    %c0_i32_0 = arith.constant 0 : i32
    %c0_i32_1 = arith.constant 0 : i32
    return %c0_i32, %c0_i32_0 : i32, i32
  }
  func.func @transform_3(%arg0: i32, %arg1: i32) -> (i32, i32) {
    %c0_i32 = arith.constant 0 : i32
    %c0_i32_0 = arith.constant 0 : i32
    return %arg0, %c0_i32 : i32, i32
  }
}

</mosaic_0001>

<llo_original>
// kernel: tpu_custom_call.1
$region0: #{tpu_custom_call.1}
  #allocation0 [shape = 'u32[]', space=smem, size = 0x4, offset = 0x4, fixed_abs, tag = 'smem constant byte address 0x4 - core index']
  #allocation1 [shape = 'u32[144,128]{1,0:T(1,128)}', space=vmem, size = 0x12000, scoped, tag = 'internal scratch']
  #allocation2 [shape = 'f32[2,32]{1,0:T(2,128)}', space=vmem, size = 0x400, scoped, tag = 'scratch operand']
  %s0 = inlined_call_operand.vmem [shape: bf16[2,256,32], index: 0, kind: input, shape index: {}]
  %s1 = inlined_call_operand.vmem [shape: bf16[32,128], index: 1, kind: input, shape index: {}]
  %s2 = inlined_call_operand.vmem [shape: f32[1,128], index: 2, kind: input, shape index: {}]
  %s3 = inlined_call_operand.hbm [shape: f32[2,128], index: 3, kind: output, shape index: {}]
  %s4 = sld [smem:[#allocation0]]
  $region30: #{tpu_custom_call.1} parent=0
    _
  %s6 = ssub.s32 1, %s4
  %s7 = scalar_select 0, %s6, %s4
  $region1: #{tpu_custom_call.1} parent=0
    #allocation3 [shape = 'u8[1024]{0}', space=vmem, size = 0x400, scoped, tag = 'output window, operand 0, single buffered']
    #allocation4 [shape = 's32[1]{0}', space=sflag, size = 0x4, scoped, tag = 'scoped memory for tpu_custom_call.1']
    %8 = vsyncpa [#allocation4], 0
    // Predicated region
    $region2: #{tpu_custom_call.1} parent=1 // pred_check
      _
    $region3: #{tpu_custom_call.1} parent=1 // pred_check_branch
      %10 = sbr.rel (0) target = $region5
    $region4: #{tpu_custom_call.1} parent=1 // pred_region
      _
    $region5: #{tpu_custom_call.1} parent=1 // pred_fallthru
      _
    // Predicated region
    $region6: #{tpu_custom_call.1} parent=1 // pred_check
      _
    $region7: #{tpu_custom_call.1} parent=1 // pred_check_branch
      %12 = sbr.rel (0) target = $region9
    $region8: #{tpu_custom_call.1} parent=1 // pred_region
      _
    $region9: #{tpu_custom_call.1} parent=1 // pred_fallthru
      _
    // Predicated region
    $region10: #{tpu_custom_call.1} parent=1 // pred_check
      _
    $region11: #{tpu_custom_call.1} parent=1 // pred_check_branch
      %14 = sbr.rel (0) target = $region13
    $region12: #{tpu_custom_call.1} parent=1 // pred_region
      _
    $region13: #{tpu_custom_call.1} parent=1 // pred_fallthru
      _
    %p16 = scmp.eq.s32.totalorder 0, 0
    // Predicated region
    $region14: #{tpu_custom_call.1} parent=1 // pred_check
      %p17 = pneg %p16
    $region15: #{tpu_custom_call.1} parent=1 // pred_check_branch
      %19 = sbr.rel (%p17) target = $region17
    $region16: #{tpu_custom_call.1} parent=1 // pred_region
      %vm20 = vcmask 254976
      %21 = vst.msk [vmem:[#allocation2] sm:$0x3] %vm20, 0.0
    $region17: #{tpu_custom_call.1} parent=1 // pred_fallthru
      _
    %v22 = vld [vmem:[%s0] sm:$0xf]
    %v23 = vld [vmem:[%s0 + $0x4] sm:$0xf]
    %v24 = vld [vmem:[%s0 + $0x8] sm:$0xf]
    %v25 = vld [vmem:[%s0 + $0xc] sm:$0xf]
    %v26 = vld [vmem:[%s0 + $0x10] sm:$0xf]
    %v27 = vld [vmem:[%s0 + $0x14] sm:$0xf]
    %v28 = vld [vmem:[%s0 + $0x18] sm:$0xf]
    %v29 = vld [vmem:[%s0 + $0x1c] sm:$0xf]
    %v30 = vld [vmem:[%s0 + $0x20] sm:$0xf]
    %v31 = vld [vmem:[%s0 + $0x24] sm:$0xf]
    %v32 = vld [vmem:[%s0 + $0x28] sm:$0xf]
    %v33 = vld [vmem:[%s0 + $0x2c] sm:$0xf]
    %v34 = vld [vmem:[%s0 + $0x30] sm:$0xf]
    %v35 = vld [vmem:[%s0 + $0x34] sm:$0xf]
    %v36 = vld [vmem:[%s0 + $0x38] sm:$0xf]
    %v37 = vld [vmem:[%s0 + $0x3c] sm:$0xf]
    %v38 = vld [vmem:[%s0 + $0x40] sm:$0xf]
    %v39 = vld [vmem:[%s0 + $0x44] sm:$0xf]
    %v40 = vld [vmem:[%s0 + $0x48] sm:$0xf]
    %v41 = vld [vmem:[%s0 + $0x4c] sm:$0xf]
    %v42 = vld [vmem:[%s0 + $0x50] sm:$0xf]
    %v43 = vld [vmem:[%s0 + $0x54] sm:$0xf]
    %v44 = vld [vmem:[%s0 + $0x58] sm:$0xf]
    %v45 = vld [vmem:[%s0 + $0x5c] sm:$0xf]
    %v46 = vld [vmem:[%s0 + $0x60] sm:$0xf]
    %v47 = vld [vmem:[%s0 + $0x64] sm:$0xf]
    %v48 = vld [vmem:[%s0 + $0x68] sm:$0xf]
    %v49 = vld [vmem:[%s0 + $0x6c] sm:$0xf]
    %v50 = vld [vmem:[%s0 + $0x70] sm:$0xf]
    %v51 = vld [vmem:[%s0 + $0x74] sm:$0xf]
    %v52 = vld [vmem:[%s0 + $0x78] sm:$0xf]
    %v53 = vld [vmem:[%s0 + $0x7c] sm:$0xf]
    %v54 = vld [vmem:[%s0 + $0x80] sm:$0xf]
    %v55 = vld [vmem:[%s0 + $0x84] sm:$0xf]
    %v56 = vld [vmem:[%s0 + $0x88] sm:$0xf]
    %v57 = vld [vmem:[%s0 + $0x8c] sm:$0xf]
    %v58 = vld [vmem:[%s0 + $0x90] sm:$0xf]
    %v59 = vld [vmem:[%s0 + $0x94] sm:$0xf]
    %v60 = vld [vmem:[%s0 + $0x98] sm:$0xf]
    %v61 = vld [vmem:[%s0 + $0x9c] sm:$0xf]
    %v62 = vld [vmem:[%s0 + $0xa0] sm:$0xf]
    %v63 = vld [vmem:[%s0 + $0xa4] sm:$0xf]
    %v64 = vld [vmem:[%s0 + $0xa8] sm:$0xf]
    %v65 = vld [vmem:[%s0 + $0xac] sm:$0xf]
    %v66 = vld [vmem:[%s0 + $0xb0] sm:$0xf]
    %v67 = vld [vmem:[%s0 + $0xb4] sm:$0xf]
    %v68 = vld [vmem:[%s0 + $0xb8] sm:$0xf]
    %v69 = vld [vmem:[%s0 + $0xbc] sm:$0xf]
    %v70 = vld [vmem:[%s0 + $0xc0] sm:$0xf]
    %v71 = vld [vmem:[%s0 + $0xc4] sm:$0xf]
    %v72 = vld [vmem:[%s0 + $0xc8] sm:$0xf]
    %v73 = vld [vmem:[%s0 + $0xcc] sm:$0xf]
    %v74 = vld [vmem:[%s0 + $0xd0] sm:$0xf]
    %v75 = vld [vmem:[%s0 + $0xd4] sm:$0xf]
    %v76 = vld [vmem:[%s0 + $0xd8] sm:$0xf]
    %v77 = vld [vmem:[%s0 + $0xdc] sm:$0xf]
    %v78 = vld [vmem:[%s0 + $0xe0] sm:$0xf]
    %v79 = vld [vmem:[%s0 + $0xe4] sm:$0xf]
    %v80 = vld [vmem:[%s0 + $0xe8] sm:$0xf]
    %v81 = vld [vmem:[%s0 + $0xec] sm:$0xf]
    %v82 = vld [vmem:[%s0 + $0xf0] sm:$0xf]
    %v83 = vld [vmem:[%s0 + $0xf4] sm:$0xf]
    %v84 = vld [vmem:[%s0 + $0xf8] sm:$0xf]
    %v85 = vld [vmem:[%s0 + $0xfc] sm:$0xf]
    %v86 = vld [vmem:[#allocation2] sm:$0x3]
    %v87 = vunpack.c.l.bf16 %v22
    %v88 = vunpack.c.l.bf16 %v23
    %v89 = vunpack.c.l.bf16 %v24
    %v90 = vunpack.c.l.bf16 %v25
    %v91 = vunpack.c.l.bf16 %v26
    %v92 = vunpack.c.l.bf16 %v27
    %v93 = vunpack.c.l.bf16 %v28
    %v94 = vunpack.c.l.bf16 %v29
    %v95 = vunpack.c.l.bf16 %v30
    %v96 = vunpack.c.l.bf16 %v31
    %v97 = vunpack.c.l.bf16 %v32
    %v98 = vunpack.c.l.bf16 %v33
    %v99 = vunpack.c.l.bf16 %v34
    %v100 = vunpack.c.l.bf16 %v35
    %v101 = vunpack.c.l.bf16 %v36
    %v102 = vunpack.c.l.bf16 %v37
    %v103 = vunpack.c.l.bf16 %v38
    %v104 = vunpack.c.l.bf16 %v39
    %v105 = vunpack.c.l.bf16 %v40
    %v106 = vunpack.c.l.bf16 %v41
    %v107 = vunpack.c.l.bf16 %v42
    %v108 = vunpack.c.l.bf16 %v43
    %v109 = vunpack.c.l.bf16 %v44
    %v110 = vunpack.c.l.bf16 %v45
    %v111 = vunpack.c.l.bf16 %v46
    %v112 = vunpack.c.l.bf16 %v47
    %v113 = vunpack.c.l.bf16 %v48
    %v114 = vunpack.c.l.bf16 %v49
    %v115 = vunpack.c.l.bf16 %v50
    %v116 = vunpack.c.l.bf16 %v51
    %v117 = vunpack.c.l.bf16 %v52
    %v118 = vunpack.c.l.bf16 %v53
    %v119 = vunpack.c.l.bf16 %v54
    %v120 = vunpack.c.l.bf16 %v55
    %v121 = vunpack.c.l.bf16 %v56
    %v122 = vunpack.c.l.bf16 %v57
    %v123 = vunpack.c.l.bf16 %v58
    %v124 = vunpack.c.l.bf16 %v59
    %v125 = vunpack.c.l.bf16 %v60
    %v126 = vunpack.c.l.bf16 %v61
    %v127 = vunpack.c.l.bf16 %v62
    %v128 = vunpack.c.l.bf16 %v63
    %v129 = vunpack.c.l.bf16 %v64
    %v130 = vunpack.c.l.bf16 %v65
    %v131 = vunpack.c.l.bf16 %v66
    %v132 = vunpack.c.l.bf16 %v67
    %v133 = vunpack.c.l.bf16 %v68
    %v134 = vunpack.c.l.bf16 %v69
    %v135 = vunpack.c.l.bf16 %v70
    %v136 = vunpack.c.l.bf16 %v71
    %v137 = vunpack.c.l.bf16 %v72
    %v138 = vunpack.c.l.bf16 %v73
    %v139 = vunpack.c.l.bf16 %v74
    %v140 = vunpack.c.l.bf16 %v75
    %v141 = vunpack.c.l.bf16 %v76
    %v142 = vunpack.c.l.bf16 %v77
    %v143 = vunpack.c.l.bf16 %v78
    %v144 = vunpack.c.l.bf16 %v79
    %v145 = vunpack.c.l.bf16 %v80
    %v146 = vunpack.c.l.bf16 %v81
    %v147 = vunpack.c.l.bf16 %v82
    %v148 = vunpack.c.l.bf16 %v83
    %v149 = vunpack.c.l.bf16 %v84
    %v150 = vunpack.c.l.bf16 %v85
    %vm151 = vcmask 261120
    %v152 = vsel %vm151, %v87, 0.0
    %v153 = vsel %vm151, %v88, 0.0
    %v154 = vadd.f32 %v152, %v153
    %v155 = vsel %vm151, %v89, 0.0
    %v156 = vadd.f32 %v154, %v155
    %v157 = vsel %vm151, %v90, 0.0
    %v158 = vadd.f32 %v156, %v157
    %v159 = vsel %vm151, %v91, 0.0
    %v160 = vadd.f32 %v158, %v159
    %v161 = vsel %vm151, %v92, 0.0
    %v162 = vadd.f32 %v160, %v161
    %v163 = vsel %vm151, %v93, 0.0
    %v164 = vadd.f32 %v162, %v163
    %v165 = vsel %vm151, %v94, 0.0
    %v166 = vadd.f32 %v164, %v165
    %v167 = vsel %vm151, %v95, 0.0
    %v168 = vadd.f32 %v166, %v167
    %v169 = vsel %vm151, %v96, 0.0
    %v170 = vadd.f32 %v168, %v169
    %v171 = vsel %vm151, %v97, 0.0
    %v172 = vadd.f32 %v170, %v171
    %v173 = vsel %vm151, %v98, 0.0
    %v174 = vadd.f32 %v172, %v173
    %v175 = vsel %vm151, %v99, 0.0
    %v176 = vadd.f32 %v174, %v175
    %v177 = vsel %vm151, %v100, 0.0
    %v178 = vadd.f32 %v176, %v177
    %v179 = vsel %vm151, %v101, 0.0
    %v180 = vadd.f32 %v178, %v179
    %v181 = vsel %vm151, %v102, 0.0
    %v182 = vadd.f32 %v180, %v181
    %v183 = vsel %vm151, %v103, 0.0
    %v184 = vadd.f32 %v182, %v183
    %v185 = vsel %vm151, %v104, 0.0
    %v186 = vadd.f32 %v184, %v185
    %v187 = vsel %vm151, %v105, 0.0
    %v188 = vadd.f32 %v186, %v187
    %v189 = vsel %vm151, %v106, 0.0
    %v190 = vadd.f32 %v188, %v189
    %v191 = vsel %vm151, %v107, 0.0
    %v192 = vadd.f32 %v190, %v191
    %v193 = vsel %vm151, %v108, 0.0
    %v194 = vadd.f32 %v192, %v193
    %v195 = vsel %vm151, %v109, 0.0
    %v196 = vadd.f32 %v194, %v195
    %v197 = vsel %vm151, %v110, 0.0
    %v198 = vadd.f32 %v196, %v197
    %v199 = vsel %vm151, %v111, 0.0
    %v200 = vadd.f32 %v198, %v199
    %v201 = vsel %vm151, %v112, 0.0
    %v202 = vadd.f32 %v200, %v201
    %v203 = vsel %vm151, %v113, 0.0
    %v204 = vadd.f32 %v202, %v203
    %v205 = vsel %vm151, %v114, 0.0
    %v206 = vadd.f32 %v204, %v205
    %v207 = vsel %vm151, %v115, 0.0
    %v208 = vadd.f32 %v206, %v207
    %v209 = vsel %vm151, %v116, 0.0
    %v210 = vadd.f32 %v208, %v209
    %v211 = vsel %vm151, %v117, 0.0
    %v212 = vadd.f32 %v210, %v211
    %v213 = vsel %vm151, %v118, 0.0
    %v214 = vadd.f32 %v212, %v213
    %v215 = vrot.slane %v214, 4
    %v216 = vadd.f32 %v214, %v215
    %v217 = vrot.slane %v216, 2
    %v218 = vadd.f32 %v216, %v217
    %v219 = vrot.slane %v218, 1
    %v220 = vadd.f32 %v218, %v219
    %v221 = vsel %vm151, %v119, 0.0
    %v222 = vsel %vm151, %v120, 0.0
    %v223 = vadd.f32 %v221, %v222
    %v224 = vsel %vm151, %v121, 0.0
    %v225 = vadd.f32 %v223, %v224
    %v226 = vsel %vm151, %v122, 0.0
    %v227 = vadd.f32 %v225, %v226
    %v228 = vsel %vm151, %v123, 0.0
    %v229 = vadd.f32 %v227, %v228
    %v230 = vsel %vm151, %v124, 0.0
    %v231 = vadd.f32 %v229, %v230
    %v232 = vsel %vm151, %v125, 0.0
    %v233 = vadd.f32 %v231, %v232
    %v234 = vsel %vm151, %v126, 0.0
    %v235 = vadd.f32 %v233, %v234
    %v236 = vsel %vm151, %v127, 0.0
    %v237 = vadd.f32 %v235, %v236
    %v238 = vsel %vm151, %v128, 0.0
    %v239 = vadd.f32 %v237, %v238
    %v240 = vsel %vm151, %v129, 0.0
    %v241 = vadd.f32 %v239, %v240
    %v242 = vsel %vm151, %v130, 0.0
    %v243 = vadd.f32 %v241, %v242
    %v244 = vsel %vm151, %v131, 0.0
    %v245 = vadd.f32 %v243, %v244
    %v246 = vsel %vm151, %v132, 0.0
    %v247 = vadd.f32 %v245, %v246
    %v248 = vsel %vm151, %v133, 0.0
    %v249 = vadd.f32 %v247, %v248
    %v250 = vsel %vm151, %v134, 0.0
    %v251 = vadd.f32 %v249, %v250
    %v252 = vsel %vm151, %v135, 0.0
    %v253 = vadd.f32 %v251, %v252
    %v254 = vsel %vm151, %v136, 0.0
    %v255 = vadd.f32 %v253, %v254
    %v256 = vsel %vm151, %v137, 0.0
    %v257 = vadd.f32 %v255, %v256
    %v258 = vsel %vm151, %v138, 0.0
    %v259 = vadd.f32 %v257, %v258
    %v260 = vsel %vm151, %v139, 0.0
    %v261 = vadd.f32 %v259, %v260
    %v262 = vsel %vm151, %v140, 0.0
    %v263 = vadd.f32 %v261, %v262
    %v264 = vsel %vm151, %v141, 0.0
    %v265 = vadd.f32 %v263, %v264
    %v266 = vsel %vm151, %v142, 0.0
    %v267 = vadd.f32 %v265, %v266
    %v268 = vsel %vm151, %v143, 0.0
    %v269 = vadd.f32 %v267, %v268
    %v270 = vsel %vm151, %v144, 0.0
    %v271 = vadd.f32 %v269, %v270
    %v272 = vsel %vm151, %v145, 0.0
    %v273 = vadd.f32 %v271, %v272
    %v274 = vsel %vm151, %v146, 0.0
    %v275 = vadd.f32 %v273, %v274
    %v276 = vsel %vm151, %v147, 0.0
    %v277 = vadd.f32 %v275, %v276
    %v278 = vsel %vm151, %v148, 0.0
    %v279 = vadd.f32 %v277, %v278
    %v280 = vsel %vm151, %v149, 0.0
    %v281 = vadd.f32 %v279, %v280
    %v282 = vsel %vm151, %v150, 0.0
    %v283 = vadd.f32 %v281, %v282
    %v284 = vrot.slane %v283, 4
    %v285 = vadd.f32 %v283, %v284
    %v286 = vrot.slane %v285, 2
    %v287 = vadd.f32 %v285, %v286
    %v288 = vrot.slane %v287, 1
    %v289 = vadd.f32 %v287, %v288
    %vm292 = vcmask 1041409
    %v293 = vsel %vm292, %v289, %v220
    %v295 = vadd.f32 %v86, %v293
    %vm296 = vcmask 254976
    %297 = vst.msk [vmem:[#allocation2] sm:$0x3] %vm296, %v295
    // Predicated region
    $region18: #{tpu_custom_call.1} parent=1 // pred_check
      %p298 = pneg %p16
    $region19: #{tpu_custom_call.1} parent=1 // pred_check_branch
      %300 = sbr.rel (%p298) target = $region21
    $region20: #{tpu_custom_call.1} parent=1 // pred_region
      %v301 = vld [vmem:[#allocation2] sm:$0x3]
      %v302 = vpack.c.bf16 %v301, %v301
      %v303 = vld [vmem:[%s1] sm:$0xf]
      %v304 = vld [vmem:[%s1 + $0x4] sm:$0xf]
      %v305 = vld [vmem:[%s1 + $0x8] sm:$0xf]
      %v306 = vld [vmem:[%s1 + $0xc] sm:$0xf]
      %v307 = vld [vmem:[%s2] sm:$0x1]
      %v309 = vlaneseq
      %v310 = vshrl.u32 %v309, 7
      %v311 = vsub.s32 0, %v310
      %v312 = vrot.slane %v307, %v311
      %v318 = vunpack.c.l.b16 %v303
      %v319 = vunpack.c.l.b16 %v304
      %v320 = vunpack.c.l.b16 %v305
      %v321 = vunpack.c.l.b16 %v306
      %v322 = vpack.c.b16 %v319, %v318
      %v323 = vpack.c.b16 %v321, %v320
      %v327 = vsel %vm151, %v302, 0
      %329 = vmatprep.subr.bf16.mxu0 0
      %330 = vmatpush1.bf16.msra.mxu0 %v322
      %331 = vmatprep.subr.bf16.mxu0 0
      %332 = vmatpush1.bf16.msra.mxu0 %v323
      %333 = vmatprep.subr.bf16.mxu0 0
      %334 = vmatpush1.bf16.msra.mxu0 0
      %335 = vmatprep.subr.bf16.mxu0 0
      %336 = vmatpush1.bf16.msra.mxu0 0
      %337 = vmatprep.subr.bf16.mxu0 0
      %338 = vmatpush1.bf16.msra.mxu0 0
      %339 = vmatprep.subr.bf16.mxu0 0
      %340 = vmatpush1.bf16.msra.mxu0 0
      %341 = vmatprep.subr.bf16.mxu0 0
      %342 = vmatpush1.bf16.msra.mxu0 0
      %343 = vmatprep.subr.bf16.mxu0 0
      %344 = vmatpush1.bf16.msra.mxu0 0
      %345 = vmatprep.subr.bf16.mxu0 0
      %346 = vmatpush1.bf16.msra.mxu0 0
      %347 = vmatprep.subr.bf16.mxu0 0
      %348 = vmatpush1.bf16.msra.mxu0 0
      %349 = vmatprep.subr.bf16.mxu0 0
      %350 = vmatpush1.bf16.msra.mxu0 0
      %351 = vmatprep.subr.bf16.mxu0 0
      %352 = vmatpush1.bf16.msra.mxu0 0
      %353 = vmatprep.subr.bf16.mxu0 0
      %354 = vmatpush1.bf16.msra.mxu0 0
      %355 = vmatprep.subr.bf16.mxu0 0
      %356 = vmatpush1.bf16.msra.mxu0 0
      %357 = vmatprep.subr.bf16.mxu0 0
      %358 = vmatpush1.bf16.msra.mxu0 0
      %359 = vmatprep.subr.bf16.mxu0 0
      %360 = vmatpush1.bf16.msra.mxu0 0
      %361 = vmatprep.mubr.bf16.mxu0 0
      %362 = vmatmul.mubr.bf16.gmra.mrb[0].mxu0 %v327
      %v363 = vpop.f32.mrb[0].mxu0
      %v364 = vadd.f32 %v312, %v363
      %v365 = vpop.f32.mrb[0].mxu0
      %v366 = vpop.f32.mrb[0].mxu0
      %v367 = vpop.f32.mrb[0].mxu0
      %368 = vdwg.mxu0
      %369 = vst [vmem:[#allocation3] sm:$0x3] %v364
    $region21: #{tpu_custom_call.1} parent=1 // pred_fallthru
      _
    // Predicated region
    $region22: #{tpu_custom_call.1} parent=1 // pred_check
      _
    $region23: #{tpu_custom_call.1} parent=1 // pred_check_branch
      %371 = sbr.rel (0) target = $region25
    $region24: #{tpu_custom_call.1} parent=1 // pred_region
      %s373 = ssub.s32 32, 32
      %374 = vsyncadd [#allocation4], %s373
      %s376 = sshll.u32 [#allocation3], 4
      %s377 = int_to_ptr.vmem [resolvable:$true] %s376
      %379 = dma.vmem_to_hbm [thread:$0]  %s377, 32, %s3, [#allocation4]
    $region25: #{tpu_custom_call.1} parent=1 // pred_fallthru
      _
    // Predicated region
    $region26: #{tpu_custom_call.1} parent=1 // pred_check
      _
    $region27: #{tpu_custom_call.1} parent=1 // pred_check_branch
      %381 = sbr.rel (0) target = $region29
    $region28: #{tpu_custom_call.1} parent=1 // pred_region
      %382 = dma.done [#allocation4], 32
    $region29: #{tpu_custom_call.1} parent=1 // pred_fallthru
      _
    %383 = vsyncpa [#allocation4], 1

</llo_original>
